<compile_context>
chip_gen: v7x
topology: tpu7x:2x2x1
jax: 0.10.0
libtpu: 0.0.40
codegen_flags: <defaults>
</compile_context>

<pallas_src>
import jax
import jax.numpy as jnp
from jax import lax
from jax.experimental import pallas as pl
from jax.experimental.pallas import tpu as pltpu


def mlp_kernel(x_ref, w1_ref, b1_ref, w2_ref, b2_ref, o_ref):
    # x_ref:  (TB, D)   w1_ref: (H1, D)   b1_ref: (H1, 1)
    # w2_ref: (H2, H1)  b2_ref: (H2, 1)   o_ref:  (H2, TB)   (batch on the lane axis)
    x = x_ref[...]
    w1 = w1_ref[...]

    # hT = relu(W1 @ x^T + b1): contract the feature axis of both operands on the MXU.
    hT = lax.dot_general(
        w1, x,
        dimension_numbers=(((1,), (1,)), ((), ())),
        preferred_element_type=jnp.float32,
    )                                             # (H1, TB), lane-dense
    hT = jnp.maximum(hT + b1_ref[...], 0.0)

    # yT = relu(W2 @ hT + b2): tiny second matmul, lane-dense output.
    yT = jnp.dot(w2_ref[...], hT, preferred_element_type=jnp.float32)  # (H2, TB)
    yT = jnp.maximum(yT + b2_ref[...], 0.0)

    o_ref[...] = yT.astype(o_ref.dtype)


def _round_up(n, m):
    return ((n + m - 1) // m) * m


def mlp_forward(x, w1, b1, w2, b2, *, block_b=512):
    """x: (B, D) f32. w1: (H1, D), b1: (H1,), w2: (H2, H1), b2: (H2,)  (PyTorch layout)."""
    B, D = x.shape
    H1 = w1.shape[0]
    H2 = w2.shape[0]

    # Lane-friendly batch tile: multiple of 128, capped by block_b; pad B up to a multiple.
    TB = block_b if B >= block_b else max(128, _round_up(B, 128))
    B_pad = _round_up(B, TB)
    if B_pad != B:
        x = jnp.pad(x, ((0, B_pad - B), (0, 0)))

    b1c = b1.reshape(H1, 1)
    b2c = b2.reshape(H2, 1)

    grid = (B_pad // TB,)

    yT = pl.pallas_call(
        mlp_kernel,
        out_shape=jax.ShapeDtypeStruct((H2, B_pad), x.dtype),
        grid_spec=pl.GridSpec(
            grid=grid,
            in_specs=[
                pl.BlockSpec((TB, D), lambda i: (i, 0)),    # x: streamed per tile
                pl.BlockSpec((H1, D), lambda i: (0, 0)),    # weights stay resident
                pl.BlockSpec((H1, 1), lambda i: (0, 0)),
                pl.BlockSpec((H2, H1), lambda i: (0, 0)),
                pl.BlockSpec((H2, 1), lambda i: (0, 0)),
            ],
            out_specs=pl.BlockSpec((H2, TB), lambda i: (0, i)),
        ),
        compiler_params=pltpu.CompilerParams(
            dimension_semantics=("parallel",),
        ),
    )(x, w1, b1c, w2, b2c)

    # Drop batch padding and restore the module's (B, H2) output layout.
    return yT[:, :B].T


if __name__ == "__main__":
    key = jax.random.PRNGKey(0)
    DIMS, H1, H2 = 32, 8, 4
    k_x, k_w1, k_b1, k_w2, k_b2 = jax.random.split(key, 5)

    # Parameters in PyTorch nn.Linear layout: W is (out_features, in_features).
    w1 = jax.random.normal(k_w1, (H1, DIMS), dtype=jnp.float32) * (1.0 / DIMS ** 0.5)
    b1 = jax.random.normal(k_b1, (H1,), dtype=jnp.float32) * 0.1
    w2 = jax.random.normal(k_w2, (H2, H1), dtype=jnp.float32) * (1.0 / H1 ** 0.5)
    b2 = jax.random.normal(k_b2, (H2,), dtype=jnp.float32) * 0.1

    def ref_fn(x):
        return jnp.maximum(jnp.maximum(x @ w1.T + b1, 0.0) @ w2.T + b2, 0.0)

    # Check both the tiled path (2 x 512-row tiles, parallel grid) and the
    # small-batch padded path (B=8 -> one 128-row tile).
    for B in (1024, 8):
        kx = jax.random.fold_in(k_x, B)
        x = jax.random.normal(kx, (B, DIMS), dtype=jnp.float32)

        out = jax.block_until_ready(mlp_forward(x, w1, b1, w2, b2))
        ref = ref_fn(x)

        assert out.shape == (B, H2)
        assert jnp.allclose(out, ref, atol=1e-5, rtol=1e-5), float(
            jnp.max(jnp.abs(out - ref))
        )

    print("KERNEL_OK")
</pallas_src>

<mosaic_0001>
module attributes {stable_mosaic.version = 11 : i64} {
  func.func @mlp_kernel(%arg0: i32, %arg1: memref<512x32xf32, #tpu.memory_space<vmem>>, %arg2: memref<8x32xf32, #tpu.memory_space<vmem>>, %arg3: memref<8x1xf32, #tpu.memory_space<vmem>>, %arg4: memref<4x8xf32, #tpu.memory_space<vmem>>, %arg5: memref<4x1xf32, #tpu.memory_space<vmem>>, %arg6: memref<4x512xf32, #tpu.memory_space<vmem>>) attributes {dimension_semantics = [#tpu.dimension_semantics<parallel>], iteration_bounds = array<i64: 2>, scalar_prefetch = 0 : i64, scratch_operands = 0 : i64, tpu.core_type = #tpu.core_type<tc>, window_params = [{transform_indices = @transform_0, window_bounds = array<i64: 512, 32>}, {pipeline_mode = #tpu.pipeline_mode<synchronous>, transform_indices = @transform_1, window_bounds = array<i64: 8, 32>}, {pipeline_mode = #tpu.pipeline_mode<synchronous>, transform_indices = @transform_2, window_bounds = array<i64: 8, 1>}, {pipeline_mode = #tpu.pipeline_mode<synchronous>, transform_indices = @transform_3, window_bounds = array<i64: 4, 8>}, {pipeline_mode = #tpu.pipeline_mode<synchronous>, transform_indices = @transform_4, window_bounds = array<i64: 4, 1>}, {transform_indices = @transform_5, window_bounds = array<i64: 4, 512>}]} {
    %c0 = arith.constant 0 : index
    %c0_0 = arith.constant 0 : index
    %0 = vector.load %arg1[%c0, %c0_0] : memref<512x32xf32, #tpu.memory_space<vmem>>, vector<512x32xf32>
    %c0_1 = arith.constant 0 : index
    %c0_2 = arith.constant 0 : index
    %1 = vector.load %arg2[%c0_1, %c0_2] : memref<8x32xf32, #tpu.memory_space<vmem>>, vector<8x32xf32>
    %cst = arith.constant dense<0.000000e+00> : vector<8x512xf32>
    %2 = tpu.matmul %1, %0, %cst {dimension_numbers = #tpu.dot_dimension_numbers<[1], [1], [0], [0], [0, 0, 1, 0], [], []>} : vector<8x32xf32>, vector<512x32xf32>, vector<8x512xf32> -> vector<8x512xf32>
    %c0_3 = arith.constant 0 : index
    %c0_4 = arith.constant 0 : index
    %3 = vector.load %arg3[%c0_3, %c0_4] : memref<8x1xf32, #tpu.memory_space<vmem>>, vector<8x1xf32>
    %4 = vector.broadcast %3 : vector<8x1xf32> to vector<8x512xf32>
    %5 = arith.addf %2, %4 : vector<8x512xf32>
    %cst_5 = arith.constant 0.000000e+00 : f32
    %6 = vector.broadcast %cst_5 : f32 to vector<8x512xf32>
    %7 = arith.maximumf %5, %6 : vector<8x512xf32>
    %c0_6 = arith.constant 0 : index
    %c0_7 = arith.constant 0 : index
    %8 = vector.load %arg4[%c0_6, %c0_7] : memref<4x8xf32, #tpu.memory_space<vmem>>, vector<4x8xf32>
    %cst_8 = arith.constant dense<0.000000e+00> : vector<4x512xf32>
    %9 = tpu.matmul %8, %7, %cst_8 {dimension_numbers = #tpu.dot_dimension_numbers<[1], [0], [0], [1], [0, 0, 1, 1], [], []>} : vector<4x8xf32>, vector<8x512xf32>, vector<4x512xf32> -> vector<4x512xf32>
    %c0_9 = arith.constant 0 : index
    %c0_10 = arith.constant 0 : index
    %10 = vector.load %arg5[%c0_9, %c0_10] : memref<4x1xf32, #tpu.memory_space<vmem>>, vector<4x1xf32>
    %11 = vector.broadcast %10 : vector<4x1xf32> to vector<4x512xf32>
    %12 = arith.addf %9, %11 : vector<4x512xf32>
    %cst_11 = arith.constant 0.000000e+00 : f32
    %13 = vector.broadcast %cst_11 : f32 to vector<4x512xf32>
    %14 = arith.maximumf %12, %13 : vector<4x512xf32>
    %c0_12 = arith.constant 0 : index
    %c0_13 = arith.constant 0 : index
    %15 = vector.load %arg6[%c0_12, %c0_13] : memref<4x512xf32, #tpu.memory_space<vmem>>, vector<4x512xf32>
    tpu.vector_store %arg6[%c0_12, %c0_13], %14 {strides = array<i32>} : memref<4x512xf32, #tpu.memory_space<vmem>>, vector<4x512xf32>,
    return
  }
  func.func @transform_0(%arg0: i32) -> (i32, i32) {
    %c0_i32 = arith.constant 0 : i32
    %c0_i32_0 = arith.constant 0 : i32
    return %arg0, %c0_i32 : i32, i32
  }
  func.func @transform_1(%arg0: i32) -> (i32, i32) {
    %c0_i32 = arith.constant 0 : i32
    %c0_i32_0 = arith.constant 0 : i32
    %c0_i32_1 = arith.constant 0 : i32
    return %c0_i32, %c0_i32_0 : i32, i32
  }
  func.func @transform_2(%arg0: i32) -> (i32, i32) {
    %c0_i32 = arith.constant 0 : i32
    %c0_i32_0 = arith.constant 0 : i32
    %c0_i32_1 = arith.constant 0 : i32
    return %c0_i32, %c0_i32_0 : i32, i32
  }
  func.func @transform_3(%arg0: i32) -> (i32, i32) {
    %c0_i32 = arith.constant 0 : i32
    %c0_i32_0 = arith.constant 0 : i32
    %c0_i32_1 = arith.constant 0 : i32
    return %c0_i32, %c0_i32_0 : i32, i32
  }
  func.func @transform_4(%arg0: i32) -> (i32, i32) {
    %c0_i32 = arith.constant 0 : i32
    %c0_i32_0 = arith.constant 0 : i32
    %c0_i32_1 = arith.constant 0 : i32
    return %c0_i32, %c0_i32_0 : i32, i32
  }
  func.func @transform_5(%arg0: i32) -> (i32, i32) {
    %c0_i32 = arith.constant 0 : i32
    %c0_i32_0 = arith.constant 0 : i32
    return %c0_i32, %arg0 : i32, i32
  }
}

</mosaic_0001>

<llo_original>
// kernel: tpu_custom_call.1
$region0: #{tpu_custom_call.1}
  #allocation0 [shape = 'u32[]', space=smem, size = 0x4, offset = 0x4, fixed_abs, tag = 'smem constant byte address 0x4 - core index']
  #allocation1 [shape = 'u32[144,128]{1,0:T(1,128)}', space=vmem, size = 0x12000, scoped, tag = 'internal scratch']
  %s0 = inlined_call_operand.vmem [shape: f32[1024,32], index: 0, kind: input, shape index: {}]
  %s1 = inlined_call_operand.vmem [shape: f32[8,32], index: 1, kind: input, shape index: {}]
  %s2 = inlined_call_operand.vmem [shape: f32[8,1], index: 2, kind: input, shape index: {}]
  %s3 = inlined_call_operand.vmem [shape: f32[4,8], index: 3, kind: input, shape index: {}]
  %s4 = inlined_call_operand.vmem [shape: f32[4,1], index: 4, kind: input, shape index: {}]
  %s5 = inlined_call_operand.hbm [shape: f32[4,1024], index: 5, kind: output, shape index: {}]
  %s6 = sld [smem:[#allocation0]]
  $region53: #{tpu_custom_call.1} parent=0
    _
  %s8 = ssub.s32 1, %s6
  %s9 = scalar_select 0, %s8, %s6
  $region1: #{tpu_custom_call.1} parent=0
    #allocation2 [shape = 'u8[16384]{0}', space=vmem, size = 0x4000, scoped, tag = 'output window, operand 0']
    #allocation3 [shape = 's32[2]{0}', space=sflag, size = 0x8, scoped, tag = 'scoped memory for tpu_custom_call.1']
    %10 = vsyncpa [#allocation3], 0
    %s11 = scalar_lea.sflag [#allocation3], 1
    %12 = vsyncpa %s11, 0
    loop: start=0, step=1, limit=4
    $region2: #{tpu_custom_call.1} parent=1 // loop_pre_header
      _
    $region3: #{tpu_custom_call.1} parent=1 // loop_header
      %s14 = sphi 0, %s18
      %p15 = scmp.ge.s32.totalorder %s14, 4
      %s24 = sphi 0, %s26
      %s27 = sphi 0, %s24
      %s28 = sphi 0, %s27
      %s44 = sphi 0, %s28
      %s48 = sphi 0, %s48
      %s50 = sphi 0, %s48
      %s51 = sphi 0, %s50
      %s65 = sphi 0, %s51
      %s69 = sphi 0, %s69
      %s71 = sphi 0, %s69
      %s72 = sphi 0, %s71
      %s86 = sphi 0, %s72
      %s90 = sphi 0, %s90
      %s92 = sphi 0, %s90
      %s93 = sphi 0, %s92
      %s107 = sphi 0, %s93
      %s111 = sphi 0, %s111
      %s113 = sphi 0, %s111
      %s114 = sphi 0, %s113
      %s128 = sphi 0, %s114
      %s134 = sphi 0, %s136
      %s137 = sphi 0, %s134
      %s138 = sphi 0, %s137
      %s154 = sphi 0, %s138
    $region4: #{tpu_custom_call.1} parent=1 // loop_header_branch
      %17 = sbr.rel (%p15) target = $region8
    $region5: #{tpu_custom_call.1} parent=1 // loop_body
      %s19 = ssub.s32 %s14, 1
      %s20 = ssub.s32 %s14, 2
      %s21 = sadd.s32 %s14, 1
      %s22 = ssub.s32 %s14, %s21
      %p23 = scmp.eq.s32.totalorder %s22, 0
      %s25 = sadd.s32 %s24, 1
      %s26 = scalar_select %p23, %s24, %s25
      %p29 = pneg %p23
      %p30 = scmp.eq.s32.totalorder %s14, 1
      %p31 = por %p29, %p30
      %p32 = scmp.ne.s32.totalorder %s24, %s27
      %p33 = scmp.eq.s32.totalorder %s14, 0
      %p34 = por %p32, %p33
      %p35 = scmp.ne.s32.totalorder %s24, %s27
      %p36 = scmp.eq.s32.totalorder %s19, 1
      %p37 = por %p35, %p36
      %p38 = scmp.ne.s32.totalorder %s27, %s28
      %p39 = scmp.eq.s32.totalorder %s19, 0
      %p40 = por %p38, %p39
      %p41 = scmp.ne.s32.totalorder %s27, %s28
      %p42 = scmp.eq.s32.totalorder %s20, 1
      %p43 = por %p41, %p42
      %p45 = scmp.ne.s32.totalorder %s28, %s44
      %p46 = scmp.eq.s32.totalorder %s20, 0
      %p47 = por %p45, %p46
      %s49 = sadd.s32 %s48, 1
      %p52 = scmp.eq.s32.totalorder %s14, 1
      %p53 = scmp.ne.s32.totalorder %s48, %s50
      %p54 = scmp.eq.s32.totalorder %s14, 0
      %p55 = por %p53, %p54
      %p56 = scmp.ne.s32.totalorder %s48, %s50
      %p57 = scmp.eq.s32.totalorder %s19, 1
      %p58 = por %p56, %p57
      %p59 = scmp.ne.s32.totalorder %s50, %s51
      %p60 = scmp.eq.s32.totalorder %s19, 0
      %p61 = por %p59, %p60
      %p62 = scmp.ne.s32.totalorder %s50, %s51
      %p63 = scmp.eq.s32.totalorder %s20, 1
      %p64 = por %p62, %p63
      %p66 = scmp.ne.s32.totalorder %s51, %s65
      %p67 = scmp.eq.s32.totalorder %s20, 0
      %p68 = por %p66, %p67
      %s70 = sadd.s32 %s69, 1
      %p73 = scmp.eq.s32.totalorder %s14, 1
      %p74 = scmp.ne.s32.totalorder %s69, %s71
      %p75 = scmp.eq.s32.totalorder %s14, 0
      %p76 = por %p74, %p75
      %p77 = scmp.ne.s32.totalorder %s69, %s71
      %p78 = scmp.eq.s32.totalorder %s19, 1
      %p79 = por %p77, %p78
      %p80 = scmp.ne.s32.totalorder %s71, %s72
      %p81 = scmp.eq.s32.totalorder %s19, 0
      %p82 = por %p80, %p81
      %p83 = scmp.ne.s32.totalorder %s71, %s72
      %p84 = scmp.eq.s32.totalorder %s20, 1
      %p85 = por %p83, %p84
      %p87 = scmp.ne.s32.totalorder %s72, %s86
      %p88 = scmp.eq.s32.totalorder %s20, 0
      %p89 = por %p87, %p88
      %s91 = sadd.s32 %s90, 1
      %p94 = scmp.eq.s32.totalorder %s14, 1
      %p95 = scmp.ne.s32.totalorder %s90, %s92
      %p96 = scmp.eq.s32.totalorder %s14, 0
      %p97 = por %p95, %p96
      %p98 = scmp.ne.s32.totalorder %s90, %s92
      %p99 = scmp.eq.s32.totalorder %s19, 1
      %p100 = por %p98, %p99
      %p101 = scmp.ne.s32.totalorder %s92, %s93
      %p102 = scmp.eq.s32.totalorder %s19, 0
      %p103 = por %p101, %p102
      %p104 = scmp.ne.s32.totalorder %s92, %s93
      %p105 = scmp.eq.s32.totalorder %s20, 1
      %p106 = por %p104, %p105
      %p108 = scmp.ne.s32.totalorder %s93, %s107
      %p109 = scmp.eq.s32.totalorder %s20, 0
      %p110 = por %p108, %p109
      %s112 = sadd.s32 %s111, 1
      %p115 = scmp.eq.s32.totalorder %s14, 1
      %p116 = scmp.ne.s32.totalorder %s111, %s113
      %p117 = scmp.eq.s32.totalorder %s14, 0
      %p118 = por %p116, %p117
      %p119 = scmp.ne.s32.totalorder %s111, %s113
      %p120 = scmp.eq.s32.totalorder %s19, 1
      %p121 = por %p119, %p120
      %p122 = scmp.ne.s32.totalorder %s113, %s114
      %p123 = scmp.eq.s32.totalorder %s19, 0
      %p124 = por %p122, %p123
      %p125 = scmp.ne.s32.totalorder %s113, %s114
      %p126 = scmp.eq.s32.totalorder %s20, 1
      %p127 = por %p125, %p126
      %p129 = scmp.ne.s32.totalorder %s114, %s128
      %p130 = scmp.eq.s32.totalorder %s20, 0
      %p131 = por %p129, %p130
      %s132 = ssub.s32 %s14, %s21
      %p133 = scmp.eq.s32.totalorder %s132, 0
      %s135 = sadd.s32 %s134, 1
      %s136 = scalar_select %p133, %s134, %s135
      %p139 = pneg %p133
      %p140 = scmp.eq.s32.totalorder %s14, 1
      %p141 = por %p139, %p140
      %p142 = scmp.ne.s32.totalorder %s134, %s137
      %p143 = scmp.eq.s32.totalorder %s14, 0
      %p144 = por %p142, %p143
      %p145 = scmp.ne.s32.totalorder %s134, %s137
      %p146 = scmp.eq.s32.totalorder %s19, 1
      %p147 = por %p145, %p146
      %p148 = scmp.ne.s32.totalorder %s137, %s138
      %p149 = scmp.eq.s32.totalorder %s19, 0
      %p150 = por %p148, %p149
      %p151 = scmp.ne.s32.totalorder %s137, %s138
      %p152 = scmp.eq.s32.totalorder %s20, 1
      %p153 = por %p151, %p152
      %p155 = scmp.ne.s32.totalorder %s138, %s154
      %p156 = scmp.eq.s32.totalorder %s20, 0
      %p157 = por %p155, %p156
      %p158 = scmp.le.s32.totalorder 1, %s14
      %p159 = scmp.lt.s32.totalorder %s14, 3
      %p160 = pnand %p158, %p159
      %p161 = pneg %p160
      // Predicated region
      $region9: #{tpu_custom_call.1} parent=5 // pred_check
        _
      $region10: #{tpu_custom_call.1} parent=5 // pred_check_branch
        %163 = sbr.rel (%p160) target = $region12
      $region11: #{tpu_custom_call.1} parent=5 // pred_region
        %s164 = ssub.s32 %s14, 1
        // Predicated region
        $region13: #{tpu_custom_call.1} parent=11 // pred_check
          %p165 = pneg %p61
        $region14: #{tpu_custom_call.1} parent=11 // pred_check_branch
          %167 = sbr.rel (%p165) target = $region16
        $region15: #{tpu_custom_call.1} parent=11 // pred_region
          _
        $region16: #{tpu_custom_call.1} parent=11 // pred_fallthru
          _
        // Predicated region
        $region17: #{tpu_custom_call.1} parent=11 // pred_check
          %p168 = pneg %p82
        $region18: #{tpu_custom_call.1} parent=11 // pred_check_branch
          %170 = sbr.rel (%p168) target = $region20
        $region19: #{tpu_custom_call.1} parent=11 // pred_region
          _
        $region20: #{tpu_custom_call.1} parent=11 // pred_fallthru
          _
        // Predicated region
        $region21: #{tpu_custom_call.1} parent=11 // pred_check
          %p171 = pneg %p103
        $region22: #{tpu_custom_call.1} parent=11 // pred_check_branch
          %173 = sbr.rel (%p171) target = $region24
        $region23: #{tpu_custom_call.1} parent=11 // pred_region
          _
        $region24: #{tpu_custom_call.1} parent=11 // pred_fallthru
          _
        // Predicated region
        $region25: #{tpu_custom_call.1} parent=11 // pred_check
          %p174 = pneg %p124
        $region26: #{tpu_custom_call.1} parent=11 // pred_check_branch
          %176 = sbr.rel (%p174) target = $region28
        $region27: #{tpu_custom_call.1} parent=11 // pred_region
          _
        $region28: #{tpu_custom_call.1} parent=11 // pred_fallthru
          _
      $region12: #{tpu_custom_call.1} parent=5 // pred_fallthru
        _
      %p177 = scmp.lt.s32.totalorder %s14, 2
      // Predicated region
      $region29: #{tpu_custom_call.1} parent=5 // pred_check
        %p178 = pneg %p177
      $region30: #{tpu_custom_call.1} parent=5 // pred_check_branch
        %180 = sbr.rel (%p178) target = $region32
      $region31: #{tpu_custom_call.1} parent=5 // pred_region
        // Predicated region
        $region33: #{tpu_custom_call.1} parent=31 // pred_check
          %p181 = pneg %p34
        $region34: #{tpu_custom_call.1} parent=31 // pred_check_branch
          %183 = sbr.rel (%p181) target = $region36
        $region35: #{tpu_custom_call.1} parent=31 // pred_region
          %s184 = smul.u32 64, %s14
          %p185 = scmp.lt.s32.totalorder %s184, 127
          %s186 = scalar_select %p185, %s184, 127
          %s187 = smul.addr %s186, 8
          %s188 = scalar_lea.vmem %s0, %s187
          %s189 = smul.u32 64, %s14
        $region36: #{tpu_custom_call.1} parent=31 // pred_fallthru
          _
      $region32: #{tpu_custom_call.1} parent=5 // pred_fallthru
        _
      %p190 = scmp.le.s32.totalorder 1, %s14
      %p191 = scmp.lt.s32.totalorder %s14, 3
      %p192 = pnand %p190, %p191
      %p193 = pneg %p192
      // Predicated region
      $region37: #{tpu_custom_call.1} parent=5 // pred_check
        _
      $region38: #{tpu_custom_call.1} parent=5 // pred_check_branch
        %195 = sbr.rel (%p192) target = $region40
      $region39: #{tpu_custom_call.1} parent=5 // pred_region
        %s196 = ssub.s32 %s14, 1
        %s197 = smul.u32 64, %s19
        %p198 = scmp.lt.s32.totalorder %s197, 127
        %s199 = scalar_select %p198, %s197, 127
        %s200 = smul.addr %s199, 8
        %s201 = scalar_lea.vmem %s0, %s200
        %p202 = pneg %p40
        %p203 = pneg %p37
        %p204 = pneg %p61
        %p205 = pneg %p58
        %p206 = pneg %p82
        %p207 = pneg %p79
        %p208 = pneg %p103
        %p209 = pneg %p100
        %p210 = pneg %p124
        %p211 = pneg %p121
        %p212 = pneg %p150
        %p213 = pneg %p147
        %s214 = sand.u32 %s137, 1
        %s215 = scalar_lea.sflag [#allocation3], %s214
        %s216 = sand.u32 %s137, 1
        %s217 = smul.addr %s216, 16
        %s218 = scalar_lea.vmem [#allocation2], %s217
        %s219 = smul.u32 64, %s19
        %p220 = scmp.lt.s32.totalorder %s219, 127
        %s221 = scalar_select %p220, %s219, 127
        %s222 = smul.addr %s221, 8
        %s223 = scalar_lea.vmem %s0, %s222
        %s224 = smul.u32 64, %s19
        %s225 = smul.u32 4, %s19
        %v226 = vld [vmem:[%s223] sm:$0xff]
        %v227 = vld [vmem:[%s223 + $0x8] sm:$0xff]
        %v228 = vld [vmem:[%s223 + $0x10] sm:$0xff]
        %v229 = vld [vmem:[%s223 + $0x18] sm:$0xff]
        %v230 = vld [vmem:[%s223 + $0x20] sm:$0xff]
        %v231 = vld [vmem:[%s223 + $0x28] sm:$0xff]
        %v232 = vld [vmem:[%s223 + $0x30] sm:$0xff]
        %v233 = vld [vmem:[%s223 + $0x38] sm:$0xff]
        %v234 = vld [vmem:[%s223 + $0x40] sm:$0xff]
        %v235 = vld [vmem:[%s223 + $0x48] sm:$0xff]
        %v236 = vld [vmem:[%s223 + $0x50] sm:$0xff]
        %v237 = vld [vmem:[%s223 + $0x58] sm:$0xff]
        %v238 = vld [vmem:[%s223 + $0x60] sm:$0xff]
        %v239 = vld [vmem:[%s223 + $0x68] sm:$0xff]
        %v240 = vld [vmem:[%s223 + $0x70] sm:$0xff]
        %v241 = vld [vmem:[%s223 + $0x78] sm:$0xff]
        %v242 = vld [vmem:[%s223 + $0x80] sm:$0xff]
        %v243 = vld [vmem:[%s223 + $0x88] sm:$0xff]
        %v244 = vld [vmem:[%s223 + $0x90] sm:$0xff]
        %v245 = vld [vmem:[%s223 + $0x98] sm:$0xff]
        %v246 = vld [vmem:[%s223 + $0xa0] sm:$0xff]
        %v247 = vld [vmem:[%s223 + $0xa8] sm:$0xff]
        %v248 = vld [vmem:[%s223 + $0xb0] sm:$0xff]
        %v249 = vld [vmem:[%s223 + $0xb8] sm:$0xff]
        %v250 = vld [vmem:[%s223 + $0xc0] sm:$0xff]
        %v251 = vld [vmem:[%s223 + $0xc8] sm:$0xff]
        %v252 = vld [vmem:[%s223 + $0xd0] sm:$0xff]
        %v253 = vld [vmem:[%s223 + $0xd8] sm:$0xff]
        %v254 = vld [vmem:[%s223 + $0xe0] sm:$0xff]
        %v255 = vld [vmem:[%s223 + $0xe8] sm:$0xff]
        %v256 = vld [vmem:[%s223 + $0xf0] sm:$0xff]
        %v257 = vld [vmem:[%s223 + $0xf8] sm:$0xff]
        %v258 = vld [vmem:[%s223 + $0x100] sm:$0xff]
        %v259 = vld [vmem:[%s223 + $0x108] sm:$0xff]
        %v260 = vld [vmem:[%s223 + $0x110] sm:$0xff]
        %v261 = vld [vmem:[%s223 + $0x118] sm:$0xff]
        %v262 = vld [vmem:[%s223 + $0x120] sm:$0xff]
        %v263 = vld [vmem:[%s223 + $0x128] sm:$0xff]
        %v264 = vld [vmem:[%s223 + $0x130] sm:$0xff]
        %v265 = vld [vmem:[%s223 + $0x138] sm:$0xff]
        %v266 = vld [vmem:[%s223 + $0x140] sm:$0xff]
        %v267 = vld [vmem:[%s223 + $0x148] sm:$0xff]
        %v268 = vld [vmem:[%s223 + $0x150] sm:$0xff]
        %v269 = vld [vmem:[%s223 + $0x158] sm:$0xff]
        %v270 = vld [vmem:[%s223 + $0x160] sm:$0xff]
        %v271 = vld [vmem:[%s223 + $0x168] sm:$0xff]
        %v272 = vld [vmem:[%s223 + $0x170] sm:$0xff]
        %v273 = vld [vmem:[%s223 + $0x178] sm:$0xff]
        %v274 = vld [vmem:[%s223 + $0x180] sm:$0xff]
        %v275 = vld [vmem:[%s223 + $0x188] sm:$0xff]
        %v276 = vld [vmem:[%s223 + $0x190] sm:$0xff]
        %v277 = vld [vmem:[%s223 + $0x198] sm:$0xff]
        %v278 = vld [vmem:[%s223 + $0x1a0] sm:$0xff]
        %v279 = vld [vmem:[%s223 + $0x1a8] sm:$0xff]
        %v280 = vld [vmem:[%s223 + $0x1b0] sm:$0xff]
        %v281 = vld [vmem:[%s223 + $0x1b8] sm:$0xff]
        %v282 = vld [vmem:[%s223 + $0x1c0] sm:$0xff]
        %v283 = vld [vmem:[%s223 + $0x1c8] sm:$0xff]
        %v284 = vld [vmem:[%s223 + $0x1d0] sm:$0xff]
        %v285 = vld [vmem:[%s223 + $0x1d8] sm:$0xff]
        %v286 = vld [vmem:[%s223 + $0x1e0] sm:$0xff]
        %v287 = vld [vmem:[%s223 + $0x1e8] sm:$0xff]
        %v288 = vld [vmem:[%s223 + $0x1f0] sm:$0xff]
        %v289 = vld [vmem:[%s223 + $0x1f8] sm:$0xff]
        %v290 = vld [vmem:[%s1] sm:$0xff]
        %v291 = vld [vmem:[%s2] sm:$0xff]
        %293 = vset.pattern.permute.xlu0 0
        %294 = vperm.xlu0 %293, %v291
        %v295 = vpop.permute.xlu0 %294
        %vm297 = vcmask 261120
        %v299 = vsel %vm297, %v290, 0
        %v302 = vsel %vm297, %v226, 0
        %v305 = vsel %vm297, %v227, 0
        %v308 = vsel %vm297, %v228, 0
        %v311 = vsel %vm297, %v229, 0
        %v314 = vsel %vm297, %v230, 0
        %v317 = vsel %vm297, %v231, 0
        %v320 = vsel %vm297, %v232, 0
        %v323 = vsel %vm297, %v233, 0
        %v326 = vsel %vm297, %v234, 0
        %v329 = vsel %vm297, %v235, 0
        %v332 = vsel %vm297, %v236, 0
        %v335 = vsel %vm297, %v237, 0
        %v338 = vsel %vm297, %v238, 0
        %v341 = vsel %vm297, %v239, 0
        %v344 = vsel %vm297, %v240, 0
        %v347 = vsel %vm297, %v241, 0
        %v350 = vsel %vm297, %v242, 0
        %v353 = vsel %vm297, %v243, 0
        %v356 = vsel %vm297, %v244, 0
        %v359 = vsel %vm297, %v245, 0
        %v362 = vsel %vm297, %v246, 0
        %v365 = vsel %vm297, %v247, 0
        %v368 = vsel %vm297, %v248, 0
        %v371 = vsel %vm297, %v249, 0
        %v374 = vsel %vm297, %v250, 0
        %v377 = vsel %vm297, %v251, 0
        %v380 = vsel %vm297, %v252, 0
        %v383 = vsel %vm297, %v253, 0
        %v386 = vsel %vm297, %v254, 0
        %v389 = vsel %vm297, %v255, 0
        %v392 = vsel %vm297, %v256, 0
        %v395 = vsel %vm297, %v257, 0
        %v398 = vsel %vm297, %v258, 0
        %v401 = vsel %vm297, %v259, 0
        %v404 = vsel %vm297, %v260, 0
        %v407 = vsel %vm297, %v261, 0
        %v410 = vsel %vm297, %v262, 0
        %v413 = vsel %vm297, %v263, 0
        %v416 = vsel %vm297, %v264, 0
        %v419 = vsel %vm297, %v265, 0
        %v422 = vsel %vm297, %v266, 0
        %v425 = vsel %vm297, %v267, 0
        %v428 = vsel %vm297, %v268, 0
        %v431 = vsel %vm297, %v269, 0
        %v434 = vsel %vm297, %v270, 0
        %v437 = vsel %vm297, %v271, 0
        %v440 = vsel %vm297, %v272, 0
        %v443 = vsel %vm297, %v273, 0
        %v446 = vsel %vm297, %v274, 0
        %v449 = vsel %vm297, %v275, 0
        %v452 = vsel %vm297, %v276, 0
        %v455 = vsel %vm297, %v277, 0
        %v458 = vsel %vm297, %v278, 0
        %v461 = vsel %vm297, %v279, 0
        %v464 = vsel %vm297, %v280, 0
        %v467 = vsel %vm297, %v281, 0
        %v470 = vsel %vm297, %v282, 0
        %v473 = vsel %vm297, %v283, 0
        %v476 = vsel %vm297, %v284, 0
        %v479 = vsel %vm297, %v285, 0
        %v482 = vsel %vm297, %v286, 0
        %v485 = vsel %vm297, %v287, 0
        %v488 = vsel %vm297, %v288, 0
        %v491 = vsel %vm297, %v289, 0
        %493 = vmatprep.subr.mxu0 0.0
        %494 = vmatpush1.xpose.msra.mxu0 %v302
        %495 = vmatprep.subr.mxu0 0.0
        %496 = vmatpush1.xpose.msra.mxu0 %v305
        %497 = vmatprep.subr.mxu0 0.0
        %498 = vmatpush1.xpose.msra.mxu0 %v308
        %499 = vmatprep.subr.mxu0 0.0
        %500 = vmatpush1.xpose.msra.mxu0 %v311
        %501 = vmatprep.subr.mxu0 0.0
        %502 = vmatpush1.xpose.msra.mxu0 %v314
        %503 = vmatprep.subr.mxu0 0.0
        %504 = vmatpush1.xpose.msra.mxu0 %v317
        %505 = vmatprep.subr.mxu0 0.0
        %506 = vmatpush1.xpose.msra.mxu0 %v320
        %507 = vmatprep.subr.mxu0 0.0
        %508 = vmatpush1.xpose.msra.mxu0 %v323
        %509 = vmatprep.subr.mxu0 0.0
        %510 = vmatpush1.xpose.msra.mxu0 %v326
        %511 = vmatprep.subr.mxu0 0.0
        %512 = vmatpush1.xpose.msra.mxu0 %v329
        %513 = vmatprep.subr.mxu0 0.0
        %514 = vmatpush1.xpose.msra.mxu0 %v332
        %515 = vmatprep.subr.mxu0 0.0
        %516 = vmatpush1.xpose.msra.mxu0 %v335
        %517 = vmatprep.subr.mxu0 0.0
        %518 = vmatpush1.xpose.msra.mxu0 %v338
        %519 = vmatprep.subr.mxu0 0.0
        %520 = vmatpush1.xpose.msra.mxu0 %v341
        %521 = vmatprep.subr.mxu0 0.0
        %522 = vmatpush1.xpose.msra.mxu0 %v344
        %523 = vmatprep.subr.mxu0 0.0
        %524 = vmatpush1.xpose.msra.mxu0 %v347
        %525 = vmatprep.subr.mxu0 0.0
        %526 = vmatpush1.xpose.msra.mxu0 %v350
        %527 = vmatprep.subr.mxu0 0.0
        %528 = vmatpush1.xpose.msra.mxu0 %v353
        %529 = vmatprep.subr.mxu0 0.0
        %530 = vmatpush1.xpose.msra.mxu0 %v356
        %531 = vmatprep.subr.mxu0 0.0
        %532 = vmatpush1.xpose.msra.mxu0 %v359
        %533 = vmatprep.subr.mxu0 0.0
        %534 = vmatpush1.xpose.msra.mxu0 %v362
        %535 = vmatprep.subr.mxu0 0.0
        %536 = vmatpush1.xpose.msra.mxu0 %v365
        %537 = vmatprep.subr.mxu0 0.0
        %538 = vmatpush1.xpose.msra.mxu0 %v368
        %539 = vmatprep.subr.mxu0 0.0
        %540 = vmatpush1.xpose.msra.mxu0 %v371
        %541 = vmatprep.subr.mxu0 0.0
        %542 = vmatpush1.xpose.msra.mxu0 %v374
        %543 = vmatprep.subr.mxu0 0.0
        %544 = vmatpush1.xpose.msra.mxu0 %v377
        %545 = vmatprep.subr.mxu0 0.0
        %546 = vmatpush1.xpose.msra.mxu0 %v380
        %547 = vmatprep.subr.mxu0 0.0
        %548 = vmatpush1.xpose.msra.mxu0 %v383
        %549 = vmatprep.subr.mxu0 0.0
        %550 = vmatpush1.xpose.msra.mxu0 %v386
        %551 = vmatprep.subr.mxu0 0.0
        %552 = vmatpush1.xpose.msra.mxu0 %v389
        %553 = vmatprep.subr.mxu0 0.0
        %554 = vmatpush1.xpose.msra.mxu0 %v392
        %555 = vmatprep.subr.mxu0 0.0
        %556 = vmatpush1.xpose.msra.mxu0 %v395
        %557 = vmatprep.mubr.f32.mxu0 0.0
        %558 = vmatmul.mubr.f32.gmra.mrb[0].mxu0 %v299
        %v559 = vpop.f32.mrb[0].mxu0
        %v560 = vadd.f32 %v295, %v559
        %v561 = vpop.f32.mrb[0].mxu0
        %v562 = vadd.f32 %v295, %v561
        %563 = vdwg.mxu0
        %564 = vmatprep.subr.mxu0 0.0
        %565 = vmatpush1.xpose.msra.mxu0 %v398
        %566 = vmatprep.subr.mxu0 0.0
        %567 = vmatpush1.xpose.msra.mxu0 %v401
        %568 = vmatprep.subr.mxu0 0.0
        %569 = vmatpush1.xpose.msra.mxu0 %v404
        %570 = vmatprep.subr.mxu0 0.0
        %571 = vmatpush1.xpose.msra.mxu0 %v407
        %572 = vmatprep.subr.mxu0 0.0
        %573 = vmatpush1.xpose.msra.mxu0 %v410
        %574 = vmatprep.subr.mxu0 0.0
        %575 = vmatpush1.xpose.msra.mxu0 %v413
        %576 = vmatprep.subr.mxu0 0.0
        %577 = vmatpush1.xpose.msra.mxu0 %v416
        %578 = vmatprep.subr.mxu0 0.0
        %579 = vmatpush1.xpose.msra.mxu0 %v419
        %580 = vmatprep.subr.mxu0 0.0
        %581 = vmatpush1.xpose.msra.mxu0 %v422
        %582 = vmatprep.subr.mxu0 0.0
        %583 = vmatpush1.xpose.msra.mxu0 %v425
        %584 = vmatprep.subr.mxu0 0.0
        %585 = vmatpush1.xpose.msra.mxu0 %v428
        %586 = vmatprep.subr.mxu0 0.0
        %587 = vmatpush1.xpose.msra.mxu0 %v431
        %588 = vmatprep.subr.mxu0 0.0
        %589 = vmatpush1.xpose.msra.mxu0 %v434
        %590 = vmatprep.subr.mxu0 0.0
        %591 = vmatpush1.xpose.msra.mxu0 %v437
        %592 = vmatprep.subr.mxu0 0.0
        %593 = vmatpush1.xpose.msra.mxu0 %v440
        %594 = vmatprep.subr.mxu0 0.0
        %595 = vmatpush1.xpose.msra.mxu0 %v443
        %596 = vmatprep.subr.mxu0 0.0
        %597 = vmatpush1.xpose.msra.mxu0 %v446
        %598 = vmatprep.subr.mxu0 0.0
        %599 = vmatpush1.xpose.msra.mxu0 %v449
        %600 = vmatprep.subr.mxu0 0.0
        %601 = vmatpush1.xpose.msra.mxu0 %v452
        %602 = vmatprep.subr.mxu0 0.0
        %603 = vmatpush1.xpose.msra.mxu0 %v455
        %604 = vmatprep.subr.mxu0 0.0
        %605 = vmatpush1.xpose.msra.mxu0 %v458
        %606 = vmatprep.subr.mxu0 0.0
        %607 = vmatpush1.xpose.msra.mxu0 %v461
        %608 = vmatprep.subr.mxu0 0.0
        %609 = vmatpush1.xpose.msra.mxu0 %v464
        %610 = vmatprep.subr.mxu0 0.0
        %611 = vmatpush1.xpose.msra.mxu0 %v467
        %612 = vmatprep.subr.mxu0 0.0
        %613 = vmatpush1.xpose.msra.mxu0 %v470
        %614 = vmatprep.subr.mxu0 0.0
        %615 = vmatpush1.xpose.msra.mxu0 %v473
        %616 = vmatprep.subr.mxu0 0.0
        %617 = vmatpush1.xpose.msra.mxu0 %v476
        %618 = vmatprep.subr.mxu0 0.0
        %619 = vmatpush1.xpose.msra.mxu0 %v479
        %620 = vmatprep.subr.mxu0 0.0
        %621 = vmatpush1.xpose.msra.mxu0 %v482
        %622 = vmatprep.subr.mxu0 0.0
        %623 = vmatpush1.xpose.msra.mxu0 %v485
        %624 = vmatprep.subr.mxu0 0.0
        %625 = vmatpush1.xpose.msra.mxu0 %v488
        %626 = vmatprep.subr.mxu0 0.0
        %627 = vmatpush1.xpose.msra.mxu0 %v491
        %628 = vmatprep.mubr.f32.mxu0 0.0
        %629 = vmatmul.mubr.f32.gmra.mrb[0].mxu0 %v299
        %v630 = vpop.f32.mrb[0].mxu0
        %v631 = vadd.f32 %v295, %v630
        %v632 = vpop.f32.mrb[0].mxu0
        %v633 = vadd.f32 %v295, %v632
        %634 = vdwg.mxu0
        %v635 = vmax.f32 %v560, 0.0
        %v636 = vmax.f32 %v562, 0.0
        %v637 = vmax.f32 %v631, 0.0
        %v638 = vmax.f32 %v633, 0.0
        %v639 = vld [vmem:[%s3] sm:$0xf]
        %v640 = vld [vmem:[%s4] sm:$0xf]
        %642 = vset.pattern.permute.xlu0 0
        %643 = vperm.xlu0 %642, %v640
        %v644 = vpop.permute.xlu0 %643
        %vm646 = vcmask 64512
        %v648 = vsel %vm646, %v639, 0
        %650 = vmatprep.subr.mxu0 %v636
        %651 = vmatpush1.msra.mxu0 %v635
        %652 = vmatprep.subr.mxu0 0.0
        %653 = vmatpush1.msra.mxu0 0.0
        %654 = vmatprep.subr.mxu0 0.0
        %655 = vmatpush1.msra.mxu0 0.0
        %656 = vmatprep.subr.mxu0 0.0
        %657 = vmatpush1.msra.mxu0 0.0
        %658 = vmatprep.subr.mxu0 0.0
        %659 = vmatpush1.msra.mxu0 0.0
        %660 = vmatprep.subr.mxu0 0.0
        %661 = vmatpush1.msra.mxu0 0.0
        %662 = vmatprep.subr.mxu0 0.0
        %663 = vmatpush1.msra.mxu0 0.0
        %664 = vmatprep.subr.mxu0 0.0
        %665 = vmatpush1.msra.mxu0 0.0
        %666 = vmatprep.subr.mxu0 0.0
        %667 = vmatpush1.msra.mxu0 0.0
        %668 = vmatprep.subr.mxu0 0.0
        %669 = vmatpush1.msra.mxu0 0.0
        %670 = vmatprep.subr.mxu0 0.0
        %671 = vmatpush1.msra.mxu0 0.0
        %672 = vmatprep.subr.mxu0 0.0
        %673 = vmatpush1.msra.mxu0 0.0
        %674 = vmatprep.subr.mxu0 0.0
        %675 = vmatpush1.msra.mxu0 0.0
        %676 = vmatprep.subr.mxu0 0.0
        %677 = vmatpush1.msra.mxu0 0.0
        %678 = vmatprep.subr.mxu0 0.0
        %679 = vmatpush1.msra.mxu0 0.0
        %680 = vmatprep.subr.mxu0 0.0
        %681 = vmatpush1.msra.mxu0 0.0
        %682 = vmatprep.subr.mxu0 0.0
        %683 = vmatpush1.msra.mxu0 0.0
        %684 = vmatprep.subr.mxu0 0.0
        %685 = vmatpush1.msra.mxu0 0.0
        %686 = vmatprep.subr.mxu0 0.0
        %687 = vmatpush1.msra.mxu0 0.0
        %688 = vmatprep.subr.mxu0 0.0
        %689 = vmatpush1.msra.mxu0 0.0
        %690 = vmatprep.subr.mxu0 0.0
        %691 = vmatpush1.msra.mxu0 0.0
        %692 = vmatprep.subr.mxu0 0.0
        %693 = vmatpush1.msra.mxu0 0.0
        %694 = vmatprep.subr.mxu0 0.0
        %695 = vmatpush1.msra.mxu0 0.0
        %696 = vmatprep.subr.mxu0 0.0
        %697 = vmatpush1.msra.mxu0 0.0
        %698 = vmatprep.subr.mxu0 0.0
        %699 = vmatpush1.msra.mxu0 0.0
        %700 = vmatprep.subr.mxu0 0.0
        %701 = vmatpush1.msra.mxu0 0.0
        %702 = vmatprep.subr.mxu0 0.0
        %703 = vmatpush1.msra.mxu0 0.0
        %704 = vmatprep.subr.mxu0 0.0
        %705 = vmatpush1.msra.mxu0 0.0
        %706 = vmatprep.subr.mxu0 0.0
        %707 = vmatpush1.msra.mxu0 0.0
        %708 = vmatprep.subr.mxu0 0.0
        %709 = vmatpush1.msra.mxu0 0.0
        %710 = vmatprep.subr.mxu0 0.0
        %711 = vmatpush1.msra.mxu0 0.0
        %712 = vmatprep.subr.mxu0 0.0
        %713 = vmatpush1.msra.mxu0 0.0
        %714 = vmatprep.mubr.f32.mxu0 0.0
        %715 = vmatmul.mubr.f32.gmra.mrb[0].mxu0 %v648
        %v716 = vpop.f32.mrb[0].mxu0
        %v717 = vadd.f32 %v644, %v716
        %v718 = vpop.f32.mrb[0].mxu0
        %v719 = vadd.f32 %v644, %v718
        %720 = vdwg.mxu0
        %721 = vmatprep.subr.mxu0 %v638
        %722 = vmatpush1.msra.mxu0 %v637
        %723 = vmatprep.subr.mxu0 0.0
        %724 = vmatpush1.msra.mxu0 0.0
        %725 = vmatprep.subr.mxu0 0.0
        %726 = vmatpush1.msra.mxu0 0.0
        %727 = vmatprep.subr.mxu0 0.0
        %728 = vmatpush1.msra.mxu0 0.0
        %729 = vmatprep.subr.mxu0 0.0
        %730 = vmatpush1.msra.mxu0 0.0
        %731 = vmatprep.subr.mxu0 0.0
        %732 = vmatpush1.msra.mxu0 0.0
        %733 = vmatprep.subr.mxu0 0.0
        %734 = vmatpush1.msra.mxu0 0.0
        %735 = vmatprep.subr.mxu0 0.0
        %736 = vmatpush1.msra.mxu0 0.0
        %737 = vmatprep.subr.mxu0 0.0
        %738 = vmatpush1.msra.mxu0 0.0
        %739 = vmatprep.subr.mxu0 0.0
        %740 = vmatpush1.msra.mxu0 0.0
        %741 = vmatprep.subr.mxu0 0.0
        %742 = vmatpush1.msra.mxu0 0.0
        %743 = vmatprep.subr.mxu0 0.0
        %744 = vmatpush1.msra.mxu0 0.0
        %745 = vmatprep.subr.mxu0 0.0
        %746 = vmatpush1.msra.mxu0 0.0
        %747 = vmatprep.subr.mxu0 0.0
        %748 = vmatpush1.msra.mxu0 0.0
        %749 = vmatprep.subr.mxu0 0.0
        %750 = vmatpush1.msra.mxu0 0.0
        %751 = vmatprep.subr.mxu0 0.0
        %752 = vmatpush1.msra.mxu0 0.0
        %753 = vmatprep.subr.mxu0 0.0
        %754 = vmatpush1.msra.mxu0 0.0
        %755 = vmatprep.subr.mxu0 0.0
        %756 = vmatpush1.msra.mxu0 0.0
        %757 = vmatprep.subr.mxu0 0.0
        %758 = vmatpush1.msra.mxu0 0.0
        %759 = vmatprep.subr.mxu0 0.0
        %760 = vmatpush1.msra.mxu0 0.0
        %761 = vmatprep.subr.mxu0 0.0
        %762 = vmatpush1.msra.mxu0 0.0
        %763 = vmatprep.subr.mxu0 0.0
        %764 = vmatpush1.msra.mxu0 0.0
        %765 = vmatprep.subr.mxu0 0.0
        %766 = vmatpush1.msra.mxu0 0.0
        %767 = vmatprep.subr.mxu0 0.0
        %768 = vmatpush1.msra.mxu0 0.0
        %769 = vmatprep.subr.mxu0 0.0
        %770 = vmatpush1.msra.mxu0 0.0
        %771 = vmatprep.subr.mxu0 0.0
        %772 = vmatpush1.msra.mxu0 0.0
        %773 = vmatprep.subr.mxu0 0.0
        %774 = vmatpush1.msra.mxu0 0.0
        %775 = vmatprep.subr.mxu0 0.0
        %776 = vmatpush1.msra.mxu0 0.0
        %777 = vmatprep.subr.mxu0 0.0
        %778 = vmatpush1.msra.mxu0 0.0
        %779 = vmatprep.subr.mxu0 0.0
        %780 = vmatpush1.msra.mxu0 0.0
        %781 = vmatprep.subr.mxu0 0.0
        %782 = vmatpush1.msra.mxu0 0.0
        %783 = vmatprep.subr.mxu0 0.0
        %784 = vmatpush1.msra.mxu0 0.0
        %785 = vmatprep.mubr.f32.mxu0 0.0
        %786 = vmatmul.mubr.f32.gmra.mrb[0].mxu0 %v648
        %v787 = vpop.f32.mrb[0].mxu0
        %v788 = vadd.f32 %v644, %v787
        %v789 = vpop.f32.mrb[0].mxu0
        %v790 = vadd.f32 %v644, %v789
        %791 = vdwg.mxu0
        %v792 = vmax.f32 %v717, 0.0
        %v793 = vmax.f32 %v719, 0.0
        %v794 = vmax.f32 %v788, 0.0
        %v795 = vmax.f32 %v790, 0.0
        %v800 = vcombine.low %v792, %v793
        %v801 = vcombine.low %v794, %v795
        %804 = vst [vmem:[%s218] sm:$0xff] %v800
        %805 = vst [vmem:[%s218 + $0x8] sm:$0xff] %v801
        %s806 = sand.u32 %s137, 1
        %s807 = scalar_lea.sflag [#allocation3], %s806
        %s808 = sand.u32 %s137, 1
        %s809 = smul.addr %s808, 16
        %s810 = scalar_lea.vmem [#allocation2], %s809
        // Predicated region
        $region41: #{tpu_custom_call.1} parent=39 // pred_check
          %p811 = pneg %p147
        $region42: #{tpu_custom_call.1} parent=39 // pred_check_branch
          %813 = sbr.rel (%p811) target = $region44
        $region43: #{tpu_custom_call.1} parent=39 // pred_region
          %s814 = smul.u32 4, %s19
          %s816 = ssub.s32 256, 256
          %817 = vsyncadd %s807, %s816
          %s818 = smul.addr %s814, 64
          %s819 = scalar_lea.hbm %s5, %s818
          %s821 = sshll.u32 %s810, 4
          %s822 = int_to_ptr.vmem [resolvable:$true] %s821
          %824 = dma.vmem_to_hbm [thread:$0]  %s822, 256, %s819, %s807
        $region44: #{tpu_custom_call.1} parent=39 // pred_fallthru
          _
      $region40: #{tpu_custom_call.1} parent=5 // pred_fallthru
        _
      %p825 = scmp.le.s32.totalorder 2, %s14
      // Predicated region
      $region45: #{tpu_custom_call.1} parent=5 // pred_check
        %p826 = pneg %p825
      $region46: #{tpu_custom_call.1} parent=5 // pred_check_branch
        %828 = sbr.rel (%p826) target = $region48
      $region47: #{tpu_custom_call.1} parent=5 // pred_region
        %s829 = ssub.s32 %s14, 2
        // Predicated region
        $region49: #{tpu_custom_call.1} parent=47 // pred_check
          %p830 = pneg %p153
        $region50: #{tpu_custom_call.1} parent=47 // pred_check_branch
          %832 = sbr.rel (%p830) target = $region52
        $region51: #{tpu_custom_call.1} parent=47 // pred_region
          %s833 = sand.u32 %s138, 1
          %s834 = scalar_lea.sflag [#allocation3], %s833
          %s835 = sand.u32 %s138, 1
          %s836 = smul.addr %s835, 16
          %s837 = scalar_lea.vmem [#allocation2], %s836
          %838 = dma.done %s834, 256
        $region52: #{tpu_custom_call.1} parent=47 // pred_fallthru
          _
      $region48: #{tpu_custom_call.1} parent=5 // pred_fallthru
        _
    $region6: #{tpu_custom_call.1} parent=1 // loop_footer
      %s18 = sadd.s32 1, %s14
    $region7: #{tpu_custom_call.1} parent=1 // loop_footer_branch
      %13 = sbr.rel target = $region3
    $region8: #{tpu_custom_call.1} parent=1 // loop_exit
      _
    %839 = vsyncpa [#allocation3], 1
    %s840 = scalar_lea.sflag [#allocation3], 1
    %841 = vsyncpa %s840, 1

</llo_original>
